<compile_context>
chip_gen: v7x
topology: tpu7x:2x2x1
jax: 0.10.0
libtpu: 0.0.40
codegen_flags: <defaults>
</compile_context>

<pallas_src>
import functools

import jax
import jax.numpy as jnp
from jax.experimental import pallas as pl
from jax.experimental.pallas import tpu as pltpu

_CLASS_WEIGHTS = (0.1, 0.9)   # nn.CrossEntropyLoss(torch.FloatTensor([0.1, 0.9]))
_SUB = 8
_LANE = 128
_BLOCK_BYTES_TARGET = 8 * 1024 * 1024   # per-grid-step single-buffer budget


def _round_up(x, m):
    return (x + m - 1) // m * m


def _cdiv(a, b):
    return (a + b - 1) // b


def _wce_kernel(*refs, n_maps, th, height, w0, w1, needs_mask):
    """Per-tile partial sums for weighted 2-class cross-entropy.

    refs layout: [z_ref per logit map (2, TH, W)], t_ref (TH, W) int,
                 num_ref (8, 128) f32, den_ref (8, 128) f32.
    num = sum over valid pixels of  w[t] * (sum_m NLL_m)
    den = sum over valid pixels of  w[t]
    """
    z_refs = refs[:n_maps]
    t_ref = refs[n_maps]
    num_ref = refs[n_maps + 1]
    den_ref = refs[n_maps + 2]

    h = pl.program_id(1)

    def _tile(masked):
        t = t_ref[...].astype(jnp.float32)            # (TH, W), values in {0,1}
        if masked:
            rows = jax.lax.broadcasted_iota(jnp.int32, t.shape, 0)
            valid = (h * th + rows) < height

        w = w0 + (w1 - w0) * t                        # per-pixel class weight
        if masked:
            w = jnp.where(valid, w, 0.0)              # pad rows drop from both sums

        sign = 1.0 - 2.0 * t                          # +1 if t==0, -1 if t==1
        nll_tot = None
        for z_ref in z_refs:
            z0 = z_ref[0].astype(jnp.float32)         # (TH, W) class-0 logits
            z1 = z_ref[1].astype(jnp.float32)         # (TH, W) class-1 logits
            d = sign * (z1 - z0)
            if masked:
                d = jnp.where(valid, d, 0.0)          # keep exp/log finite on pad rows
            # softplus(d): 2 transcendentals vs 3 for logsumexp (EUP slot relief)
            nll = jnp.maximum(d, 0.0) + jnp.log(1.0 + jnp.exp(-jnp.abs(d)))
            nll_tot = nll if nll_tot is None else nll_tot + nll

        s_num = jnp.sum(w * nll_tot)
        s_den = jnp.sum(w)
        num_ref[...] = jnp.full(num_ref.shape, s_num, dtype=jnp.float32)
        den_ref[...] = jnp.full(den_ref.shape, s_den, dtype=jnp.float32)

    if not needs_mask:
        _tile(False)
    else:
        last = pl.num_programs(1) - 1

        @pl.when(h != last)
        def _():
            _tile(False)          # steady-state tiles: no mask overhead

        @pl.when(h == last)
        def _():
            _tile(True)           # only the boundary tile pays for the mask


def _weighted_ce(logit_maps, target):
    """sum_m weighted-CE(logit_maps[m], target), weights (0.1, 0.9), 'mean' red."""
    N, C, H, W = logit_maps[0].shape
    assert C == 2, "Espnet2CrossEntropyLoss uses 2 classes (weights [0.1, 0.9])"
    for z in logit_maps:
        assert z.shape == (N, C, H, W)

    # Raw integer target, reshaped (free) to NCHW-like (N, 1, H, W).
    if (not jnp.issubdtype(target.dtype, jnp.integer)) or target.dtype.itemsize > 4:
        # TODO(synk): int64/bool targets need one narrowing pass; int32/int8 are read as-is.
        target = target.astype(jnp.int32)
    target = target.reshape(N, 1, H, W)

    n_maps = len(logit_maps)
    lane_pad_w = _round_up(W, _LANE)
    z_bytes = sum(2 * z.dtype.itemsize for z in logit_maps)
    t_bytes = target.dtype.itemsize
    bytes_per_row = lane_pad_w * (z_bytes + max(t_bytes, 4))
    th_cap = max(_SUB, (_BLOCK_BYTES_TARGET // bytes_per_row) // _SUB * _SUB)

    if H <= th_cap:
        th, grid_h = H, 1
    else:
        grid_h = _cdiv(H, th_cap)
        th = _round_up(_cdiv(H, grid_h), _SUB)
        grid_h = _cdiv(H, th)

    # Give the v7x megacore at least two tiles to split when batch == 1.
    if N * grid_h < 2 and H > _SUB:
        th = _round_up(_cdiv(H, 2), _SUB)
        grid_h = _cdiv(H, th)

    needs_mask = (grid_h * th) != H

    kernel = functools.partial(
        _wce_kernel, n_maps=n_maps, th=th, height=H,
        w0=float(_CLASS_WEIGHTS[0]), w1=float(_CLASS_WEIGHTS[1]),
        needs_mask=needs_mask)

    in_specs = [pl.BlockSpec((None, 2, th, W), lambda n, h: (n, 0, h, 0))
                for _ in logit_maps]
    in_specs.append(pl.BlockSpec((None, None, th, W), lambda n, h: (n, 0, h, 0)))

    out_shape = (jax.ShapeDtypeStruct((N, grid_h, _SUB, _LANE), jnp.float32),
                 jax.ShapeDtypeStruct((N, grid_h, _SUB, _LANE), jnp.float32))
    out_specs = (pl.BlockSpec((None, None, _SUB, _LANE), lambda n, h: (n, h, 0, 0)),
                 pl.BlockSpec((None, None, _SUB, _LANE), lambda n, h: (n, h, 0, 0)))

    total_pix = N * H * W
    cost = pl.CostEstimate(
        flops=(10 * n_maps + 6) * total_pix,
        transcendentals=2 * n_maps * total_pix,
        bytes_accessed=total_pix * (z_bytes + t_bytes)
                       + 2 * N * grid_h * _SUB * _LANE * 4,
    )

    num, den = pl.pallas_call(
        kernel,
        grid=(N, grid_h),
        in_specs=in_specs,
        out_specs=out_specs,
        out_shape=out_shape,
        compiler_params=pltpu.CompilerParams(
            dimension_semantics=("parallel", "parallel"),
            vmem_limit_bytes=32 * 1024 * 1024,
        ),
        cost_estimate=cost,
    )(*logit_maps, target)

    # Tiny finalization in plain JAX: weighted mean across all tiles.
    return num[:, :, 0, 0].sum() / den[:, :, 0, 0].sum()


def espnet2_cross_entropy_loss(inputs, target):
    """Forward of Espnet2CrossEntropyLoss.

    inputs: logits (N, 2, H, W), or a 2-tuple of such logits (losses summed).
    target: (N, 1, H, W) integer class indices in {0, 1}.
    """
    if isinstance(inputs, tuple) and len(inputs) == 2:
        return _weighted_ce([inputs[0], inputs[1]], target)
    return _weighted_ce([inputs], target)


# ----------------------------- reference ----------------------------------

def _ce_ref_single(logits, target):
    N, C, H, W = logits.shape
    t = target.reshape(N, H, W).astype(jnp.int32)
    logp = jax.nn.log_softmax(logits.astype(jnp.float32), axis=1)
    lp_t = jnp.take_along_axis(logp, t[:, None, :, :], axis=1)[:, 0]
    w = jnp.asarray(_CLASS_WEIGHTS, jnp.float32)[t]
    return -(w * lp_t).sum() / w.sum()


def _ce_ref(inputs, target):
    if isinstance(inputs, tuple) and len(inputs) == 2:
        return _ce_ref_single(inputs[0], target) + _ce_ref_single(inputs[1], target)
    return _ce_ref_single(inputs, target)


if __name__ == "__main__":
    key = jax.random.PRNGKey(0)
    k1, k2, k3, k4, k5 = jax.random.split(key, 5)
    N, C, H, W = 2, 2, 16, 16
    logits_a = jax.random.normal(k1, (N, C, H, W), dtype=jnp.float32)
    logits_b = jax.random.normal(k3, (N, C, H, W), dtype=jnp.float32)
    target = (jax.random.uniform(k2, (N, 1, H, W)) > 0.5).astype(jnp.int32)

    # single-input branch
    loss = jax.block_until_ready(espnet2_cross_entropy_loss(logits_a, target))
    ref = jax.block_until_ready(_ce_ref(logits_a, target))
    assert jnp.allclose(loss, ref, atol=1e-5, rtol=1e-5), (loss, ref)

    # tuple-input branch (sum of two CE losses, fused into one pallas_call)
    loss2 = jax.block_until_ready(
        espnet2_cross_entropy_loss((logits_a, logits_b), target))
    ref2 = jax.block_until_ready(_ce_ref((logits_a, logits_b), target))
    assert jnp.allclose(loss2, ref2, atol=1e-5, rtol=1e-5), (loss2, ref2)

    # odd shapes: exercises the partial boundary tile + in-kernel mask path
    No, Ho, Wo = 1, 13, 20
    logits_c = jax.random.normal(k4, (No, C, Ho, Wo), dtype=jnp.float32)
    target_c = (jax.random.uniform(k5, (No, 1, Ho, Wo)) > 0.5).astype(jnp.int32)
    loss3 = jax.block_until_ready(espnet2_cross_entropy_loss(logits_c, target_c))
    ref3 = jax.block_until_ready(_ce_ref(logits_c, target_c))
    assert jnp.allclose(loss3, ref3, atol=1e-5, rtol=1e-5), (loss3, ref3)

    print("KERNEL_OK")
</pallas_src>

<mosaic_0001>
module attributes {stable_mosaic.version = 11 : i64} {
  func.func @_wce_kernel(%arg0: i32, %arg1: i32, %arg2: memref<1x2x16x16xf32, #tpu.memory_space<vmem>>, %arg3: memref<1x1x16x16xi32, #tpu.memory_space<vmem>>, %arg4: memref<1x1x8x128xf32, #tpu.memory_space<vmem>>, %arg5: memref<1x1x8x128xf32, #tpu.memory_space<vmem>>) attributes {dimension_semantics = [#tpu.dimension_semantics<parallel>, #tpu.dimension_semantics<parallel>], iteration_bounds = array<i64: 2, 1>, scalar_prefetch = 0 : i64, scratch_operands = 0 : i64, tpu.core_type = #tpu.core_type<tc>, window_params = [{transform_indices = @transform_0, window_bounds = array<i64: 1, 2, 16, 16>}, {transform_indices = @transform_1, window_bounds = array<i64: 1, 1, 16, 16>}, {transform_indices = @transform_2, window_bounds = array<i64: 1, 1, 8, 128>}, {transform_indices = @transform_3, window_bounds = array<i64: 1, 1, 8, 128>}]} {
    %c0 = arith.constant 0 : index
    %c0_0 = arith.constant 0 : index
    %c0_1 = arith.constant 0 : index
    %c0_2 = arith.constant 0 : index
    %0 = vector.load %arg3[%c0, %c0_0, %c0_1, %c0_2] : memref<1x1x16x16xi32, #tpu.memory_space<vmem>>, vector<1x1x16x16xi32>
    %1 = vector.shape_cast %0 : vector<1x1x16x16xi32> to vector<16x16xi32>
    %2 = arith.sitofp %1 : vector<16x16xi32> to vector<16x16xf32>
    %cst = arith.constant 8.000000e-01 : f32
    %3 = vector.broadcast %cst : f32 to vector<16x16xf32>
    %4 = arith.mulf %3, %2 : vector<16x16xf32>
    %cst_3 = arith.constant 1.000000e-01 : f32
    %5 = vector.broadcast %cst_3 : f32 to vector<16x16xf32>
    %6 = arith.addf %5, %4 : vector<16x16xf32>
    %cst_4 = arith.constant 2.000000e+00 : f32
    %7 = vector.broadcast %cst_4 : f32 to vector<16x16xf32>
    %8 = arith.mulf %7, %2 : vector<16x16xf32>
    %cst_5 = arith.constant 1.000000e+00 : f32
    %9 = vector.broadcast %cst_5 : f32 to vector<16x16xf32>
    %10 = arith.subf %9, %8 : vector<16x16xf32>
    %c0_6 = arith.constant 0 : index
    %c0_7 = arith.constant 0 : index
    %c0_8 = arith.constant 0 : index
    %c0_9 = arith.constant 0 : index
    %11 = vector.load %arg2[%c0_6, %c0_7, %c0_8, %c0_9] : memref<1x2x16x16xf32, #tpu.memory_space<vmem>>, vector<1x1x16x16xf32>
    %12 = vector.shape_cast %11 : vector<1x1x16x16xf32> to vector<16x16xf32>
    %c0_10 = arith.constant 0 : index
    %c1 = arith.constant 1 : index
    %c0_11 = arith.constant 0 : index
    %c0_12 = arith.constant 0 : index
    %13 = vector.load %arg2[%c0_10, %c1, %c0_11, %c0_12] : memref<1x2x16x16xf32, #tpu.memory_space<vmem>>, vector<1x1x16x16xf32>
    %14 = vector.shape_cast %13 : vector<1x1x16x16xf32> to vector<16x16xf32>
    %15 = arith.subf %14, %12 : vector<16x16xf32>
    %16 = arith.mulf %10, %15 : vector<16x16xf32>
    %cst_13 = arith.constant 0.000000e+00 : f32
    %17 = vector.broadcast %cst_13 : f32 to vector<16x16xf32>
    %18 = arith.maximumf %16, %17 : vector<16x16xf32>
    %19 = math.absf %16 : vector<16x16xf32>
    %cst_14 = arith.constant 0.000000e+00 : f32
    %20 = vector.broadcast %cst_14 : f32 to vector<16x16xf32>
    %21 = arith.subf %20, %19 : vector<16x16xf32>
    %22 = math.exp %21 : vector<16x16xf32>
    %cst_15 = arith.constant 1.000000e+00 : f32
    %23 = vector.broadcast %cst_15 : f32 to vector<16x16xf32>
    %24 = arith.addf %23, %22 : vector<16x16xf32>
    %25 = math.log %24 : vector<16x16xf32>
    %26 = arith.addf %18, %25 : vector<16x16xf32>
    %27 = arith.mulf %6, %26 : vector<16x16xf32>
    %28 = vector.shape_cast %27 : vector<16x16xf32> to vector<1x16x16xf32>
    %cst_16 = arith.constant dense<0.000000e+00> : vector<1xf32>
    %29 = vector.multi_reduction <add>, %28, %cst_16 [1, 2] : vector<1x16x16xf32> to vector<1xf32>
    %30 = vector.shape_cast %29 : vector<1xf32> to vector<1x1x1xf32>
    %31 = vector.extract %30[0, 0, 0] : f32 from vector<1x1x1xf32>
    %32 = vector.shape_cast %6 : vector<16x16xf32> to vector<1x16x16xf32>
    %cst_17 = arith.constant dense<0.000000e+00> : vector<1xf32>
    %33 = vector.multi_reduction <add>, %32, %cst_17 [1, 2] : vector<1x16x16xf32> to vector<1xf32>
    %34 = vector.shape_cast %33 : vector<1xf32> to vector<1x1x1xf32>
    %35 = vector.extract %34[0, 0, 0] : f32 from vector<1x1x1xf32>
    %36 = vector.broadcast %31 : f32 to vector<8x128xf32>
    %c0_18 = arith.constant 0 : index
    %c0_19 = arith.constant 0 : index
    %c0_20 = arith.constant 0 : index
    %c0_21 = arith.constant 0 : index
    %37 = vector.load %arg4[%c0_18, %c0_19, %c0_20, %c0_21] : memref<1x1x8x128xf32, #tpu.memory_space<vmem>>, vector<1x1x8x128xf32>
    %38 = vector.shape_cast %37 : vector<1x1x8x128xf32> to vector<8x128xf32>
    %39 = vector.shape_cast %36 : vector<8x128xf32> to vector<1x1x8x128xf32>
    tpu.vector_store %arg4[%c0_18, %c0_19, %c0_20, %c0_21], %39 {strides = array<i32>} : memref<1x1x8x128xf32, #tpu.memory_space<vmem>>, vector<1x1x8x128xf32>,
    %40 = vector.broadcast %35 : f32 to vector<8x128xf32>
    %c0_22 = arith.constant 0 : index
    %c0_23 = arith.constant 0 : index
    %c0_24 = arith.constant 0 : index
    %c0_25 = arith.constant 0 : index
    %41 = vector.load %arg5[%c0_22, %c0_23, %c0_24, %c0_25] : memref<1x1x8x128xf32, #tpu.memory_space<vmem>>, vector<1x1x8x128xf32>
    %42 = vector.shape_cast %41 : vector<1x1x8x128xf32> to vector<8x128xf32>
    %43 = vector.shape_cast %40 : vector<8x128xf32> to vector<1x1x8x128xf32>
    tpu.vector_store %arg5[%c0_22, %c0_23, %c0_24, %c0_25], %43 {strides = array<i32>} : memref<1x1x8x128xf32, #tpu.memory_space<vmem>>, vector<1x1x8x128xf32>,
    return
  }
  func.func @transform_0(%arg0: i32, %arg1: i32) -> (i32, i32, i32, i32) {
    %c0_i32 = arith.constant 0 : i32
    %c0_i32_0 = arith.constant 0 : i32
    %c0_i32_1 = arith.constant 0 : i32
    return %arg0, %c0_i32, %arg1, %c0_i32_0 : i32, i32, i32, i32
  }
  func.func @transform_1(%arg0: i32, %arg1: i32) -> (i32, i32, i32, i32) {
    %c0_i32 = arith.constant 0 : i32
    %c0_i32_0 = arith.constant 0 : i32
    %c0_i32_1 = arith.constant 0 : i32
    return %arg0, %c0_i32, %arg1, %c0_i32_0 : i32, i32, i32, i32
  }
  func.func @transform_2(%arg0: i32, %arg1: i32) -> (i32, i32, i32, i32) {
    %c0_i32 = arith.constant 0 : i32
    %c0_i32_0 = arith.constant 0 : i32
    %c0_i32_1 = arith.constant 0 : i32
    return %arg0, %arg1, %c0_i32, %c0_i32_0 : i32, i32, i32, i32
  }
  func.func @transform_3(%arg0: i32, %arg1: i32) -> (i32, i32, i32, i32) {
    %c0_i32 = arith.constant 0 : i32
    %c0_i32_0 = arith.constant 0 : i32
    %c0_i32_1 = arith.constant 0 : i32
    return %arg0, %arg1, %c0_i32, %c0_i32_0 : i32, i32, i32, i32
  }
}

</mosaic_0001>

<llo_original>
// kernel: tpu_custom_call.1
$region0: #{tpu_custom_call.1}
  #allocation0 [shape = 'u32[]', space=smem, size = 0x4, offset = 0x4, fixed_abs, tag = 'smem constant byte address 0x4 - core index']
  #allocation1 [shape = 'u32[144,128]{1,0:T(1,128)}', space=vmem, size = 0x12000, scoped, tag = 'internal scratch']
  %s0 = inlined_call_operand.hbm [shape: f32[2,2,16,16], index: 0, kind: input, shape index: {}]
  %s1 = inlined_call_operand.hbm [shape: s32[2,1,16,16], index: 1, kind: input, shape index: {}]
  %s2 = inlined_call_operand.hbm [shape: f32[2,1,8,128], index: 2, kind: output, shape index: {0}]
  %s3 = inlined_call_operand.hbm [shape: f32[2,1,8,128], index: 3, kind: output, shape index: {1}]
  %4 = xla_tuple %s2, %s3
  %s5 = sld [smem:[#allocation0]]
  $region57: #{tpu_custom_call.1} parent=0
    _
  %s7 = ssub.s32 1, %s5
  %s8 = scalar_select 0, %s7, %s5
  $region1: #{tpu_custom_call.1} parent=0
    #allocation2 [shape = 'u8[32768]{0}', space=vmem, size = 0x8000, scoped, tag = 'input window, operand 0']
    #allocation3 [shape = 's32[2]{0}', space=sflag, size = 0x8, scoped, tag = 'scoped memory for tpu_custom_call.1']
    #allocation4 [shape = 's32[2]{0}', space=sflag, size = 0x8, scoped, tag = 'scoped memory for tpu_custom_call.1']
    #allocation5 [shape = 'u8[16384]{0}', space=vmem, size = 0x4000, scoped, tag = 'input window, operand 1']
    #allocation6 [shape = 's32[2]{0}', space=sflag, size = 0x8, scoped, tag = 'scoped memory for tpu_custom_call.1']
    #allocation7 [shape = 'u8[8192]{0}', space=vmem, size = 0x2000, scoped, tag = 'output window, operand 0']
    #allocation8 [shape = 'u8[8192]{0}', space=vmem, size = 0x2000, scoped, tag = 'output window, operand 1']
    #allocation9 [shape = 's32[2]{0}', space=sflag, size = 0x8, scoped, tag = 'scoped memory for tpu_custom_call.1']
    %9 = vsyncpa [#allocation3], 0
    %s10 = scalar_lea.sflag [#allocation3], 1
    %11 = vsyncpa %s10, 0
    %12 = vsyncpa [#allocation6], 0
    %s13 = scalar_lea.sflag [#allocation6], 1
    %14 = vsyncpa %s13, 0
    %15 = vsyncpa [#allocation4], 0
    %s16 = scalar_lea.sflag [#allocation4], 1
    %17 = vsyncpa %s16, 0
    %18 = vsyncpa [#allocation9], 0
    %s19 = scalar_lea.sflag [#allocation9], 1
    %20 = vsyncpa %s19, 0
    loop: start=0, step=1, limit=4
    $region2: #{tpu_custom_call.1} parent=1 // loop_pre_header
      _
    $region3: #{tpu_custom_call.1} parent=1 // loop_header
      %s22 = sphi 0, %s26
      %p23 = scmp.ge.s32.totalorder %s22, 4
      %s29 = sphi 0, %s41
      %s30 = sphi 0, %s37
      %s31 = sphi 0, %s29
      %s32 = sphi 0, %s30
      %s33 = sphi 0, %s31
      %s34 = sphi 0, %s32
      %s46 = sphi 0, %s48
      %s49 = sphi 0, %s46
      %s50 = sphi 0, %s49
      %s66 = sphi 0, %s50
      %s74 = sphi 0, %s76
      %s77 = sphi 0, %s74
      %s78 = sphi 0, %s77
      %s94 = sphi 0, %s78
      %s102 = sphi 0, %s104
      %s105 = sphi 0, %s102
      %s106 = sphi 0, %s105
      %s122 = sphi 0, %s106
      %s130 = sphi 0, %s132
      %s133 = sphi 0, %s130
      %s134 = sphi 0, %s133
      %s150 = sphi 0, %s134
    $region4: #{tpu_custom_call.1} parent=1 // loop_header_branch
      %25 = sbr.rel (%p23) target = $region8
    $region5: #{tpu_custom_call.1} parent=1 // loop_body
      %s27 = ssub.s32 %s22, 1
      %s28 = ssub.s32 %s22, 2
      %s35 = sadd.s32 1, %s30
      %p36 = scmp.ge.s32.totalorder %s35, 1
      %s37 = scalar_select %p36, 0, %s35
      %s38 = sadd.s32 1, %s29
      %s39 = scalar_select %p36, %s38, %s29
      %p40 = scmp.ge.s32.totalorder %s39, 2
      %s41 = scalar_select %p40, 0, %s39
      %s42 = ssub.s32 %s29, %s41
      %s43 = ssub.s32 %s30, %s37
      %s44 = sor.u32 %s42, %s43
      %p45 = scmp.eq.s32.totalorder %s44, 0
      %s47 = sadd.s32 %s46, 1
      %s48 = scalar_select %p45, %s46, %s47
      %p51 = pneg %p45
      %p52 = scmp.eq.s32.totalorder %s22, 1
      %p53 = por %p51, %p52
      %p54 = scmp.ne.s32.totalorder %s46, %s49
      %p55 = scmp.eq.s32.totalorder %s22, 0
      %p56 = por %p54, %p55
      %p57 = scmp.ne.s32.totalorder %s46, %s49
      %p58 = scmp.eq.s32.totalorder %s27, 1
      %p59 = por %p57, %p58
      %p60 = scmp.ne.s32.totalorder %s49, %s50
      %p61 = scmp.eq.s32.totalorder %s27, 0
      %p62 = por %p60, %p61
      %p63 = scmp.ne.s32.totalorder %s49, %s50
      %p64 = scmp.eq.s32.totalorder %s28, 1
      %p65 = por %p63, %p64
      %p67 = scmp.ne.s32.totalorder %s50, %s66
      %p68 = scmp.eq.s32.totalorder %s28, 0
      %p69 = por %p67, %p68
      %s70 = ssub.s32 %s29, %s41
      %s71 = ssub.s32 %s30, %s37
      %s72 = sor.u32 %s70, %s71
      %p73 = scmp.eq.s32.totalorder %s72, 0
      %s75 = sadd.s32 %s74, 1
      %s76 = scalar_select %p73, %s74, %s75
      %p79 = pneg %p73
      %p80 = scmp.eq.s32.totalorder %s22, 1
      %p81 = por %p79, %p80
      %p82 = scmp.ne.s32.totalorder %s74, %s77
      %p83 = scmp.eq.s32.totalorder %s22, 0
      %p84 = por %p82, %p83
      %p85 = scmp.ne.s32.totalorder %s74, %s77
      %p86 = scmp.eq.s32.totalorder %s27, 1
      %p87 = por %p85, %p86
      %p88 = scmp.ne.s32.totalorder %s77, %s78
      %p89 = scmp.eq.s32.totalorder %s27, 0
      %p90 = por %p88, %p89
      %p91 = scmp.ne.s32.totalorder %s77, %s78
      %p92 = scmp.eq.s32.totalorder %s28, 1
      %p93 = por %p91, %p92
      %p95 = scmp.ne.s32.totalorder %s78, %s94
      %p96 = scmp.eq.s32.totalorder %s28, 0
      %p97 = por %p95, %p96
      %s98 = ssub.s32 %s29, %s41
      %s99 = ssub.s32 %s30, %s37
      %s100 = sor.u32 %s98, %s99
      %p101 = scmp.eq.s32.totalorder %s100, 0
      %s103 = sadd.s32 %s102, 1
      %s104 = scalar_select %p101, %s102, %s103
      %p107 = pneg %p101
      %p108 = scmp.eq.s32.totalorder %s22, 1
      %p109 = por %p107, %p108
      %p110 = scmp.ne.s32.totalorder %s102, %s105
      %p111 = scmp.eq.s32.totalorder %s22, 0
      %p112 = por %p110, %p111
      %p113 = scmp.ne.s32.totalorder %s102, %s105
      %p114 = scmp.eq.s32.totalorder %s27, 1
      %p115 = por %p113, %p114
      %p116 = scmp.ne.s32.totalorder %s105, %s106
      %p117 = scmp.eq.s32.totalorder %s27, 0
      %p118 = por %p116, %p117
      %p119 = scmp.ne.s32.totalorder %s105, %s106
      %p120 = scmp.eq.s32.totalorder %s28, 1
      %p121 = por %p119, %p120
      %p123 = scmp.ne.s32.totalorder %s106, %s122
      %p124 = scmp.eq.s32.totalorder %s28, 0
      %p125 = por %p123, %p124
      %s126 = ssub.s32 %s29, %s41
      %s127 = ssub.s32 %s30, %s37
      %s128 = sor.u32 %s126, %s127
      %p129 = scmp.eq.s32.totalorder %s128, 0
      %s131 = sadd.s32 %s130, 1
      %s132 = scalar_select %p129, %s130, %s131
      %p135 = pneg %p129
      %p136 = scmp.eq.s32.totalorder %s22, 1
      %p137 = por %p135, %p136
      %p138 = scmp.ne.s32.totalorder %s130, %s133
      %p139 = scmp.eq.s32.totalorder %s22, 0
      %p140 = por %p138, %p139
      %p141 = scmp.ne.s32.totalorder %s130, %s133
      %p142 = scmp.eq.s32.totalorder %s27, 1
      %p143 = por %p141, %p142
      %p144 = scmp.ne.s32.totalorder %s133, %s134
      %p145 = scmp.eq.s32.totalorder %s27, 0
      %p146 = por %p144, %p145
      %p147 = scmp.ne.s32.totalorder %s133, %s134
      %p148 = scmp.eq.s32.totalorder %s28, 1
      %p149 = por %p147, %p148
      %p151 = scmp.ne.s32.totalorder %s134, %s150
      %p152 = scmp.eq.s32.totalorder %s28, 0
      %p153 = por %p151, %p152
      %p154 = scmp.le.s32.totalorder 1, %s22
      %p155 = scmp.lt.s32.totalorder %s22, 3
      %p156 = pnand %p154, %p155
      %p157 = pneg %p156
      // Predicated region
      $region9: #{tpu_custom_call.1} parent=5 // pred_check
        _
      $region10: #{tpu_custom_call.1} parent=5 // pred_check_branch
        %159 = sbr.rel (%p156) target = $region12
      $region11: #{tpu_custom_call.1} parent=5 // pred_region
        %s160 = ssub.s32 %s22, 1
      $region12: #{tpu_custom_call.1} parent=5 // pred_fallthru
        _
      %p161 = scmp.lt.s32.totalorder %s22, 2
      // Predicated region
      $region13: #{tpu_custom_call.1} parent=5 // pred_check
        %p162 = pneg %p161
      $region14: #{tpu_custom_call.1} parent=5 // pred_check_branch
        %164 = sbr.rel (%p162) target = $region16
      $region15: #{tpu_custom_call.1} parent=5 // pred_region
        // Predicated region
        $region17: #{tpu_custom_call.1} parent=15 // pred_check
          %p165 = pneg %p56
        $region18: #{tpu_custom_call.1} parent=15 // pred_check_branch
          %167 = sbr.rel (%p165) target = $region20
        $region19: #{tpu_custom_call.1} parent=15 // pred_region
          %s168 = sand.u32 %s46, 1
          %s169 = scalar_lea.sflag [#allocation3], %s168
          %s170 = sand.u32 %s46, 1
          %s171 = smul.addr %s170, 32
          %s172 = scalar_lea.vmem [#allocation2], %s171
          %s173 = smul.u32 2, %s30
          %s175 = ssub.s32 512, 512
          %176 = vsyncadd %s169, %s175
          %s177 = smul.addr %s29, 4
          %s178 = sadd.s32 %s173, %s177
          %s179 = smul.addr %s178, 128
          %s180 = scalar_lea.hbm %s0, %s179
          %s181 = sshll.u32 %s172, 4
          %s182 = int_to_ptr.vmem [resolvable:$true] %s181
          %187 = dma.hbm_to_vmem [thread:$0]  %s180, 512, %s182, %s169, 128, 128, 8
        $region20: #{tpu_custom_call.1} parent=15 // pred_fallthru
          _
        // Predicated region
        $region21: #{tpu_custom_call.1} parent=15 // pred_check
          %p188 = pneg %p84
        $region22: #{tpu_custom_call.1} parent=15 // pred_check_branch
          %190 = sbr.rel (%p188) target = $region24
        $region23: #{tpu_custom_call.1} parent=15 // pred_region
          %s191 = sand.u32 %s74, 1
          %s192 = scalar_lea.sflag [#allocation6], %s191
          %s193 = sand.u32 %s74, 1
          %s194 = smul.addr %s193, 16
          %s195 = scalar_lea.vmem [#allocation5], %s194
          %s196 = smul.u32 2, %s30
          %s198 = ssub.s32 256, 256
          %199 = vsyncadd %s192, %s198
          %s200 = smul.addr %s29, 2
          %s201 = sadd.s32 %s196, %s200
          %s202 = smul.addr %s201, 128
          %s203 = scalar_lea.hbm %s1, %s202
          %s204 = sshll.u32 %s195, 4
          %s205 = int_to_ptr.vmem [resolvable:$true] %s204
          %210 = dma.hbm_to_vmem [thread:$0]  %s203, 256, %s205, %s192, 128, 128, 8
        $region24: #{tpu_custom_call.1} parent=15 // pred_fallthru
          _
      $region16: #{tpu_custom_call.1} parent=5 // pred_fallthru
        _
      %p211 = scmp.le.s32.totalorder 1, %s22
      %p212 = scmp.lt.s32.totalorder %s22, 3
      %p213 = pnand %p211, %p212
      %p214 = pneg %p213
      // Predicated region
      $region25: #{tpu_custom_call.1} parent=5 // pred_check
        _
      $region26: #{tpu_custom_call.1} parent=5 // pred_check_branch
        %216 = sbr.rel (%p213) target = $region28
      $region27: #{tpu_custom_call.1} parent=5 // pred_region
        %s217 = ssub.s32 %s22, 1
        %s218 = sand.u32 %s49, 1
        %s219 = scalar_lea.sflag [#allocation3], %s218
        %s220 = sand.u32 %s49, 1
        %s221 = smul.addr %s220, 32
        %s222 = scalar_lea.vmem [#allocation2], %s221
        // Predicated region
        $region29: #{tpu_custom_call.1} parent=27 // pred_check
          %p223 = pneg %p62
        $region30: #{tpu_custom_call.1} parent=27 // pred_check_branch
          %225 = sbr.rel (%p223) target = $region32
        $region31: #{tpu_custom_call.1} parent=27 // pred_region
          %226 = dma.done %s219, 512
        $region32: #{tpu_custom_call.1} parent=27 // pred_fallthru
          _
        %s227 = sand.u32 %s77, 1
        %s228 = scalar_lea.sflag [#allocation6], %s227
        %s229 = sand.u32 %s77, 1
        %s230 = smul.addr %s229, 16
        %s231 = scalar_lea.vmem [#allocation5], %s230
        // Predicated region
        $region33: #{tpu_custom_call.1} parent=27 // pred_check
          %p232 = pneg %p90
        $region34: #{tpu_custom_call.1} parent=27 // pred_check_branch
          %234 = sbr.rel (%p232) target = $region36
        $region35: #{tpu_custom_call.1} parent=27 // pred_region
          %235 = dma.done %s228, 256
        $region36: #{tpu_custom_call.1} parent=27 // pred_fallthru
          _
        %s236 = sand.u32 %s49, 1
        %s237 = scalar_lea.sflag [#allocation3], %s236
        %s238 = sand.u32 %s49, 1
        %s239 = smul.addr %s238, 32
        %s240 = scalar_lea.vmem [#allocation2], %s239
        %p241 = pneg %p62
        %p242 = pneg %p59
        %s243 = sand.u32 %s77, 1
        %s244 = scalar_lea.sflag [#allocation6], %s243
        %s245 = sand.u32 %s77, 1
        %s246 = smul.addr %s245, 16
        %s247 = scalar_lea.vmem [#allocation5], %s246
        %p248 = pneg %p90
        %p249 = pneg %p87
        %p250 = pneg %p118
        %p251 = pneg %p115
        %s252 = sand.u32 %s105, 1
        %s253 = scalar_lea.sflag [#allocation4], %s252
        %s254 = sand.u32 %s105, 1
        %s255 = smul.addr %s254, 8
        %s256 = scalar_lea.vmem [#allocation7], %s255
        %p257 = pneg %p146
        %p258 = pneg %p143
        %s259 = sand.u32 %s133, 1
        %s260 = scalar_lea.sflag [#allocation9], %s259
        %s261 = sand.u32 %s133, 1
        %s262 = smul.addr %s261, 8
        %s263 = scalar_lea.vmem [#allocation8], %s262
        %s264 = smul.u32 2, %s32
        %s265 = smul.u32 2, %s32
        %v266 = vld [vmem:[%s231] sm:$0xff]
        %v267 = vld [vmem:[%s231 + $0x8] sm:$0xff]
        %v268 = vcvt.s32.f32 %v266
        %v269 = vcvt.s32.f32 %v267
        %v270 = vmul.f32 %v268, 0.8
        %v271 = vmul.f32 %v269, 0.8
        %v272 = vadd.f32 %v270, 0.1
        %v273 = vadd.f32 %v271, 0.1
        %v274 = vmul.f32 %v268, 2.0
        %v275 = vmul.f32 %v269, 2.0
        %v276 = vsub.f32 1.0, %v274
        %v277 = vsub.f32 1.0, %v275
        %v278 = vld [vmem:[%s222] sm:$0xff]
        %v279 = vld [vmem:[%s222 + $0x8] sm:$0xff]
        %s280 = scalar_lea.vmem %s222, 16 [#allocation2]
        %v281 = vld [vmem:[%s280] sm:$0xff]
        %v282 = vld [vmem:[%s280 + $0x8] sm:$0xff]
        %v283 = vsub.f32 %v281, %v278
        %v284 = vsub.f32 %v282, %v279
        %v285 = vmul.f32 %v276, %v283
        %v286 = vmul.f32 %v277, %v284
        %v287 = vmax.f32 %v285, 0.0
        %v288 = vmax.f32 %v286, 0.0
        %v289 = vand.u32 2147483647, %v285
        %v290 = vand.u32 2147483647, %v286
        %v291 = vsub.f32 0.0, %v289
        %v292 = vsub.f32 0.0, %v290
        %v293 = vmul.f32 %v291, 1.442695
        %v294 = vpow.pop %v293
        %v295 = vmul.f32 %v292, 1.442695
        %v296 = vpow.pop %v295
        %v297 = vadd.f32 %v294, 1.0
        %v298 = vadd.f32 %v296, 1.0
        %v299 = vlog2.pop %v297
        %v300 = vmul.f32 %v299, 0.6931472
        %v301 = vlog2.pop %v298
        %v302 = vmul.f32 %v301, 0.6931472
        %v303 = vadd.f32 %v287, %v300
        %v304 = vadd.f32 %v288, %v302
        %v305 = vmul.f32 %v272, %v303
        %v306 = vmul.f32 %v273, %v304
        %vm307 = vcmask 130048
        %v308 = vsel %vm307, %v305, 0.0
        %v309 = vsel %vm307, %v306, 0.0
        %v310 = vadd.f32 %v308, %v309
        %311 = vadd.xlane.f32.xlu0 %v310
        %v312 = vpop.xlane.xlu0 %311
        %v313 = vrot.slane %v312, 4
        %v314 = vadd.f32 %v312, %v313
        %v315 = vrot.slane %v314, 2
        %v316 = vadd.f32 %v314, %v315
        %v317 = vrot.slane %v316, 1
        %v318 = vadd.f32 %v316, %v317
        %s319 = vtos %v318
        %v320 = vsel %vm307, %v272, 0.0
        %v321 = vsel %vm307, %v273, 0.0
        %v322 = vadd.f32 %v320, %v321
        %323 = vadd.xlane.f32.xlu0 %v322
        %v324 = vpop.xlane.xlu0 %323
        %v325 = vrot.slane %v324, 4
        %v326 = vadd.f32 %v324, %v325
        %v327 = vrot.slane %v326, 2
        %v328 = vadd.f32 %v326, %v327
        %v329 = vrot.slane %v328, 1
        %v330 = vadd.f32 %v328, %v329
        %s331 = vtos %v330
        %v332 = vstv %s319
        %333 = vst [vmem:[%s256] sm:$0xff] %v332
        %v334 = vstv %s331
        %335 = vst [vmem:[%s263] sm:$0xff] %v334
        %s336 = sand.u32 %s105, 1
        %s337 = scalar_lea.sflag [#allocation4], %s336
        %s338 = sand.u32 %s105, 1
        %s339 = smul.addr %s338, 8
        %s340 = scalar_lea.vmem [#allocation7], %s339
        %s341 = sand.u32 %s133, 1
        %s342 = scalar_lea.sflag [#allocation9], %s341
        %s343 = sand.u32 %s133, 1
        %s344 = smul.addr %s343, 8
        %s345 = scalar_lea.vmem [#allocation8], %s344
        // Predicated region
        $region37: #{tpu_custom_call.1} parent=27 // pred_check
          %p346 = pneg %p115
        $region38: #{tpu_custom_call.1} parent=27 // pred_check_branch
          %348 = sbr.rel (%p346) target = $region40
        $region39: #{tpu_custom_call.1} parent=27 // pred_region
          %s350 = ssub.s32 128, 128
          %351 = vsyncadd %s337, %s350
          %s352 = sadd.s32 %s32, %s31
          %s353 = smul.addr %s352, 128
          %s354 = scalar_lea.hbm %s2, %s353
          %s356 = sshll.u32 %s340, 4
          %s357 = int_to_ptr.vmem [resolvable:$true] %s356
          %359 = dma.vmem_to_hbm [thread:$0]  %s357, 128, %s354, %s337
        $region40: #{tpu_custom_call.1} parent=27 // pred_fallthru
          _
        // Predicated region
        $region41: #{tpu_custom_call.1} parent=27 // pred_check
          %p360 = pneg %p143
        $region42: #{tpu_custom_call.1} parent=27 // pred_check_branch
          %362 = sbr.rel (%p360) target = $region44
        $region43: #{tpu_custom_call.1} parent=27 // pred_region
          %s364 = ssub.s32 128, 128
          %365 = vsyncadd %s342, %s364
          %s366 = sadd.s32 %s32, %s31
          %s367 = smul.addr %s366, 128
          %s368 = scalar_lea.hbm %s3, %s367
          %s370 = sshll.u32 %s345, 4
          %s371 = int_to_ptr.vmem [resolvable:$true] %s370
          %373 = dma.vmem_to_hbm [thread:$0]  %s371, 128, %s368, %s342
        $region44: #{tpu_custom_call.1} parent=27 // pred_fallthru
          _
      $region28: #{tpu_custom_call.1} parent=5 // pred_fallthru
        _
      %p374 = scmp.le.s32.totalorder 2, %s22
      // Predicated region
      $region45: #{tpu_custom_call.1} parent=5 // pred_check
        %p375 = pneg %p374
      $region46: #{tpu_custom_call.1} parent=5 // pred_check_branch
        %377 = sbr.rel (%p375) target = $region48
      $region47: #{tpu_custom_call.1} parent=5 // pred_region
        %s378 = ssub.s32 %s22, 2
        // Predicated region
        $region49: #{tpu_custom_call.1} parent=47 // pred_check
          %p379 = pneg %p121
        $region50: #{tpu_custom_call.1} parent=47 // pred_check_branch
          %381 = sbr.rel (%p379) target = $region52
        $region51: #{tpu_custom_call.1} parent=47 // pred_region
          %s382 = sand.u32 %s106, 1
          %s383 = scalar_lea.sflag [#allocation4], %s382
          %s384 = sand.u32 %s106, 1
          %s385 = smul.addr %s384, 8
          %s386 = scalar_lea.vmem [#allocation7], %s385
          %387 = dma.done %s383, 128
        $region52: #{tpu_custom_call.1} parent=47 // pred_fallthru
          _
        // Predicated region
        $region53: #{tpu_custom_call.1} parent=47 // pred_check
          %p388 = pneg %p149
        $region54: #{tpu_custom_call.1} parent=47 // pred_check_branch
          %390 = sbr.rel (%p388) target = $region56
        $region55: #{tpu_custom_call.1} parent=47 // pred_region
          %s391 = sand.u32 %s134, 1
          %s392 = scalar_lea.sflag [#allocation9], %s391
          %s393 = sand.u32 %s134, 1
          %s394 = smul.addr %s393, 8
          %s395 = scalar_lea.vmem [#allocation8], %s394
          %396 = dma.done %s392, 128
        $region56: #{tpu_custom_call.1} parent=47 // pred_fallthru
          _
      $region48: #{tpu_custom_call.1} parent=5 // pred_fallthru
        _
    $region6: #{tpu_custom_call.1} parent=1 // loop_footer
      %s26 = sadd.s32 1, %s22
    $region7: #{tpu_custom_call.1} parent=1 // loop_footer_branch
      %21 = sbr.rel target = $region3
    $region8: #{tpu_custom_call.1} parent=1 // loop_exit
      _
    %397 = vsyncpa [#allocation3], 1
    %s398 = scalar_lea.sflag [#allocation3], 1
    %399 = vsyncpa %s398, 1
    %400 = vsyncpa [#allocation6], 1
    %s401 = scalar_lea.sflag [#allocation6], 1
    %402 = vsyncpa %s401, 1
    %403 = vsyncpa [#allocation4], 1
    %s404 = scalar_lea.sflag [#allocation4], 1
    %405 = vsyncpa %s404, 1
    %406 = vsyncpa [#allocation9], 1
    %s407 = scalar_lea.sflag [#allocation9], 1
    %408 = vsyncpa %s407, 1

</llo_original>
